<compile_context>
chip_gen: v7x
topology: tpu7x:2x2x1
jax: 0.10.0
libtpu: 0.0.40
codegen_flags: <defaults>
</compile_context>

<pallas_src>
import jax
import jax.numpy as jnp
from jax.experimental import pallas as pl
from jax.experimental.pallas import tpu as pltpu

LN_EPS = 1e-5


def _layernorm(h, gamma, beta, eps=LN_EPS):
    # Two-pass (centered) LayerNorm over the last dim, matching
    # torch.nn.LayerNorm (biased variance).  gamma folded into the rsqrt
    # scale -> one FMA per element.
    mean = jnp.mean(h, axis=-1, keepdims=True)
    c = h - mean
    var = jnp.mean(c * c, axis=-1, keepdims=True)
    return c * (jax.lax.rsqrt(var + eps) * gamma) + beta


def mlp_init_kernel(x_ref, w1_ref, w2_ref, w3_ref, lnp_ref, b3_ref, o_ref):
    # x tile arrives f32, cast to bf16 in VMEM; MXU matmuls accumulate in f32,
    # LayerNorm / ReLU run in f32 on the VPU.
    lnp = lnp_ref[...]                       # (6, H): b1,g1,be1,b2,g2,be2
    b1, g1, be1 = lnp[0:1, :], lnp[1:2, :], lnp[2:3, :]
    b2, g2, be2 = lnp[3:4, :], lnp[4:5, :], lnp[5:6, :]

    x = x_ref[...].astype(jnp.bfloat16)

    h = jnp.dot(x, w1_ref[...], preferred_element_type=jnp.float32) + b1
    h = jnp.maximum(_layernorm(h, g1, be1), 0.0)

    h = jnp.dot(h.astype(jnp.bfloat16), w2_ref[...],
                preferred_element_type=jnp.float32) + b2
    h = jnp.maximum(_layernorm(h, g2, be2), 0.0)

    out = jnp.dot(h.astype(jnp.bfloat16), w3_ref[...],
                  preferred_element_type=jnp.float32) + b3_ref[...]
    o_ref[...] = out.astype(o_ref.dtype)


def _round_up(x, m):
    return ((x + m - 1) // m) * m


def mlp_init_forward(x, params, *, tile_batch=1024):
    """x: [B, inp_dim] float32; params: dict of weights. Returns [B, out_dim] f32."""
    B, inp_dim = x.shape
    hidden_dim = params["w1"].shape[1]
    out_dim = params["w3"].shape[1]

    # Batch tile: multiple of the f32 sublane count (8), capped at tile_batch.
    TB = min(_round_up(tile_batch, 8), _round_up(B, 8))
    # v7x megacore: prefer >= 2 grid steps so both TensorCores get work
    # (harmless on v5e/v6e which have a single TC).
    if _round_up(B, TB) // TB < 2 and B > 8:
        TB = max(8, _round_up(pl.cdiv(B, 2), 8))
    B_pad = _round_up(B, TB)
    nb = B_pad // TB

    # Stream f32 x directly (no wrapper-side bf16 cast / extra HBM pass).
    x_p = x if B_pad == B else jnp.pad(x, ((0, B_pad - B), (0, 0)))

    # Weights are tiny (16x32, 32x32, 32x8) and VMEM-resident; the one-time
    # bf16 cast here is negligible.
    w1 = params["w1"].astype(jnp.bfloat16)
    w2 = params["w2"].astype(jnp.bfloat16)
    w3 = params["w3"].astype(jnp.bfloat16)

    # Coalesce the six (1, hidden) bias/LN params into one resident array.
    ln_params = jnp.concatenate(
        [params["b1"], params["g1"], params["be1"],
         params["b2"], params["g2"], params["be2"]], axis=0)   # (6, hidden)
    b3 = params["b3"]                                          # (1, out_dim)

    operands = (x_p, w1, w2, w3, ln_params, b3)

    def resident_spec(shape):
        # Whole array resident in VMEM; constant block index -> DMA'd once and
        # reused across all grid steps.
        nd = len(shape)
        return pl.BlockSpec(shape, lambda i, _nd=nd: (0,) * _nd)

    in_specs = [pl.BlockSpec((TB, inp_dim), lambda i: (i, 0))]      # streamed x
    in_specs += [resident_spec(op.shape) for op in operands[1:]]    # resident params

    out = pl.pallas_call(
        mlp_init_kernel,
        out_shape=jax.ShapeDtypeStruct((B_pad, out_dim), jnp.float32),
        grid=(nb,),
        in_specs=in_specs,
        # Unpadded (TB, out_dim) output blocks: last dim equals the full array
        # dim, so the (8,128) block constraint is satisfied; HBM writes are
        # only the real 8 columns.
        out_specs=pl.BlockSpec((TB, out_dim), lambda i: (i, 0)),
        compiler_params=pltpu.CompilerParams(
            dimension_semantics=("parallel",),   # megacore sharding on v7x
        ),
    )(*operands)

    return out[:B, :]


def make_params(key, inp_dim, hidden_dim, out_dim):
    """PyTorch-Linear-style init (uniform +/- 1/sqrt(fan_in)); LN gamma=1, beta=0."""
    ks = jax.random.split(key, 6)

    def lin(kw, kb, fan_in, fan_out):
        bound = 1.0 / jnp.sqrt(jnp.float32(fan_in))
        w = jax.random.uniform(kw, (fan_in, fan_out), jnp.float32, -bound, bound)
        b = jax.random.uniform(kb, (1, fan_out), jnp.float32, -bound, bound)
        return w, b

    w1, b1 = lin(ks[0], ks[1], inp_dim, hidden_dim)
    w2, b2 = lin(ks[2], ks[3], hidden_dim, hidden_dim)
    w3, b3 = lin(ks[4], ks[5], hidden_dim, out_dim)

    return dict(
        w1=w1, b1=b1, g1=jnp.ones((1, hidden_dim), jnp.float32),
        be1=jnp.zeros((1, hidden_dim), jnp.float32),
        w2=w2, b2=b2, g2=jnp.ones((1, hidden_dim), jnp.float32),
        be2=jnp.zeros((1, hidden_dim), jnp.float32),
        w3=w3, b3=b3,
    )


def _ln_ref(h, g, b, eps=LN_EPS):
    m = jnp.mean(h, axis=-1, keepdims=True)
    v = jnp.mean((h - m) ** 2, axis=-1, keepdims=True)
    return (h - m) / jnp.sqrt(v + eps) * g + b


def reference_forward_bf16(x, p):
    """Pure-JAX reference mirroring the kernel's bf16-matmul / f32-LN recipe."""
    def dot_bf16(a, w):
        return jnp.dot(a.astype(jnp.bfloat16), w.astype(jnp.bfloat16),
                       preferred_element_type=jnp.float32)

    h = jnp.maximum(_ln_ref(dot_bf16(x, p["w1"]) + p["b1"], p["g1"], p["be1"]), 0.0)
    h = jnp.maximum(_ln_ref(dot_bf16(h, p["w2"]) + p["b2"], p["g2"], p["be2"]), 0.0)
    return dot_bf16(h, p["w3"]) + p["b3"]


def reference_forward_f32(x, p):
    """Full-f32 reference matching the PyTorch module's forward."""
    h = jnp.maximum(_ln_ref(x @ p["w1"] + p["b1"], p["g1"], p["be1"]), 0.0)
    h = jnp.maximum(_ln_ref(h @ p["w2"] + p["b2"], p["g2"], p["be2"]), 0.0)
    return h @ p["w3"] + p["b3"]


if __name__ == "__main__":
    inp_dim, hidden_dim, out_dim = 16, 32, 8
    batch = 256            # exercises the batch-tiled grid (2 steps of 128 rows)

    key = jax.random.PRNGKey(0)
    kx, kp = jax.random.split(key)
    x = jax.random.normal(kx, (batch, inp_dim), jnp.float32)
    params = make_params(kp, inp_dim, hidden_dim, out_dim)

    out = mlp_init_forward(x, params)
    out = jax.block_until_ready(out)
    assert out.shape == (batch, out_dim)

    # Tight check vs a reference that uses the same bf16-matmul recipe.
    ref_bf16 = reference_forward_bf16(x, params)
    assert jnp.allclose(out, ref_bf16, atol=1e-2, rtol=1e-2), "mismatch vs bf16 reference"

    # Looser fidelity check vs the true full-f32 PyTorch-style forward.
    ref_f32 = reference_forward_f32(x, params)
    assert jnp.allclose(out, ref_f32, atol=5e-2, rtol=5e-2), "mismatch vs f32 reference"

    print("KERNEL_OK")
</pallas_src>

<mosaic_0001>
module attributes {stable_mosaic.version = 11 : i64} {
  func.func @mlp_init_kernel(%arg0: i32, %arg1: memref<128x16xf32, #tpu.memory_space<vmem>>, %arg2: memref<16x32xbf16, #tpu.memory_space<vmem>>, %arg3: memref<32x32xbf16, #tpu.memory_space<vmem>>, %arg4: memref<32x8xbf16, #tpu.memory_space<vmem>>, %arg5: memref<6x32xf32, #tpu.memory_space<vmem>>, %arg6: memref<1x8xf32, #tpu.memory_space<vmem>>, %arg7: memref<128x8xf32, #tpu.memory_space<vmem>>) attributes {dimension_semantics = [#tpu.dimension_semantics<parallel>], iteration_bounds = array<i64: 2>, scalar_prefetch = 0 : i64, scratch_operands = 0 : i64, tpu.core_type = #tpu.core_type<tc>, window_params = [{transform_indices = @transform_0, window_bounds = array<i64: 128, 16>}, {pipeline_mode = #tpu.pipeline_mode<synchronous>, transform_indices = @transform_1, window_bounds = array<i64: 16, 32>}, {pipeline_mode = #tpu.pipeline_mode<synchronous>, transform_indices = @transform_2, window_bounds = array<i64: 32, 32>}, {pipeline_mode = #tpu.pipeline_mode<synchronous>, transform_indices = @transform_3, window_bounds = array<i64: 32, 8>}, {pipeline_mode = #tpu.pipeline_mode<synchronous>, transform_indices = @transform_4, window_bounds = array<i64: 6, 32>}, {pipeline_mode = #tpu.pipeline_mode<synchronous>, transform_indices = @transform_5, window_bounds = array<i64: 1, 8>}, {transform_indices = @transform_6, window_bounds = array<i64: 128, 8>}]} {
    %c0 = arith.constant 0 : index
    %c0_0 = arith.constant 0 : index
    %0 = vector.load %arg5[%c0, %c0_0] : memref<6x32xf32, #tpu.memory_space<vmem>>, vector<6x32xf32>
    %1 = vector.extract_strided_slice %0 {offsets = [0, 0], sizes = [1, 32], strides = [1, 1]} : vector<6x32xf32> to vector<1x32xf32>
    %2 = vector.extract_strided_slice %0 {offsets = [1, 0], sizes = [1, 32], strides = [1, 1]} : vector<6x32xf32> to vector<1x32xf32>
    %3 = vector.extract_strided_slice %0 {offsets = [2, 0], sizes = [1, 32], strides = [1, 1]} : vector<6x32xf32> to vector<1x32xf32>
    %4 = vector.extract_strided_slice %0 {offsets = [3, 0], sizes = [1, 32], strides = [1, 1]} : vector<6x32xf32> to vector<1x32xf32>
    %5 = vector.extract_strided_slice %0 {offsets = [4, 0], sizes = [1, 32], strides = [1, 1]} : vector<6x32xf32> to vector<1x32xf32>
    %6 = vector.extract_strided_slice %0 {offsets = [5, 0], sizes = [1, 32], strides = [1, 1]} : vector<6x32xf32> to vector<1x32xf32>
    %c0_1 = arith.constant 0 : index
    %c0_2 = arith.constant 0 : index
    %7 = vector.load %arg1[%c0_1, %c0_2] : memref<128x16xf32, #tpu.memory_space<vmem>>, vector<128x16xf32>
    %8 = arith.truncf %7 : vector<128x16xf32> to vector<128x16xbf16>
    %c0_3 = arith.constant 0 : index
    %c0_4 = arith.constant 0 : index
    %9 = vector.load %arg2[%c0_3, %c0_4] : memref<16x32xbf16, #tpu.memory_space<vmem>>, vector<16x32xbf16>
    %cst = arith.constant dense<0.000000e+00> : vector<128x32xf32>
    %10 = tpu.matmul %8, %9, %cst {dimension_numbers = #tpu.dot_dimension_numbers<[1], [0], [0], [1], [0, 0, 1, 1], [], []>} : vector<128x16xbf16>, vector<16x32xbf16>, vector<128x32xf32> -> vector<128x32xf32>
    %11 = vector.broadcast %1 : vector<1x32xf32> to vector<128x32xf32>
    %12 = arith.addf %10, %11 : vector<128x32xf32>
    %cst_5 = arith.constant dense<0.000000e+00> : vector<128xf32>
    %13 = vector.multi_reduction <add>, %12, %cst_5 [1] : vector<128x32xf32> to vector<128xf32>
    %14 = vector.shape_cast %13 : vector<128xf32> to vector<128x1xf32>
    %cst_6 = arith.constant 3.200000e+01 : f32
    %15 = vector.broadcast %cst_6 : f32 to vector<128x1xf32>
    %16 = arith.divf %14, %15 : vector<128x1xf32>
    %17 = vector.broadcast %16 : vector<128x1xf32> to vector<128x32xf32>
    %18 = arith.subf %12, %17 : vector<128x32xf32>
    %19 = arith.mulf %18, %18 : vector<128x32xf32>
    %cst_7 = arith.constant dense<0.000000e+00> : vector<128xf32>
    %20 = vector.multi_reduction <add>, %19, %cst_7 [1] : vector<128x32xf32> to vector<128xf32>
    %21 = vector.shape_cast %20 : vector<128xf32> to vector<128x1xf32>
    %cst_8 = arith.constant 3.200000e+01 : f32
    %22 = vector.broadcast %cst_8 : f32 to vector<128x1xf32>
    %23 = arith.divf %21, %22 : vector<128x1xf32>
    %cst_9 = arith.constant 9.99999974E-6 : f32
    %24 = vector.broadcast %cst_9 : f32 to vector<128x1xf32>
    %25 = arith.addf %23, %24 : vector<128x1xf32>
    %26 = math.rsqrt %25 : vector<128x1xf32>
    %27 = vector.broadcast %26 : vector<128x1xf32> to vector<128x32xf32>
    %28 = vector.broadcast %2 : vector<1x32xf32> to vector<128x32xf32>
    %29 = arith.mulf %27, %28 : vector<128x32xf32>
    %30 = arith.mulf %18, %29 : vector<128x32xf32>
    %31 = vector.broadcast %3 : vector<1x32xf32> to vector<128x32xf32>
    %32 = arith.addf %30, %31 : vector<128x32xf32>
    %cst_10 = arith.constant 0.000000e+00 : f32
    %33 = vector.broadcast %cst_10 : f32 to vector<128x32xf32>
    %34 = arith.maximumf %32, %33 : vector<128x32xf32>
    %35 = arith.truncf %34 : vector<128x32xf32> to vector<128x32xbf16>
    %c0_11 = arith.constant 0 : index
    %c0_12 = arith.constant 0 : index
    %36 = vector.load %arg3[%c0_11, %c0_12] : memref<32x32xbf16, #tpu.memory_space<vmem>>, vector<32x32xbf16>
    %cst_13 = arith.constant dense<0.000000e+00> : vector<128x32xf32>
    %37 = tpu.matmul %35, %36, %cst_13 {dimension_numbers = #tpu.dot_dimension_numbers<[1], [0], [0], [1], [0, 0, 1, 1], [], []>} : vector<128x32xbf16>, vector<32x32xbf16>, vector<128x32xf32> -> vector<128x32xf32>
    %38 = vector.broadcast %4 : vector<1x32xf32> to vector<128x32xf32>
    %39 = arith.addf %37, %38 : vector<128x32xf32>
    %cst_14 = arith.constant dense<0.000000e+00> : vector<128xf32>
    %40 = vector.multi_reduction <add>, %39, %cst_14 [1] : vector<128x32xf32> to vector<128xf32>
    %41 = vector.shape_cast %40 : vector<128xf32> to vector<128x1xf32>
    %cst_15 = arith.constant 3.200000e+01 : f32
    %42 = vector.broadcast %cst_15 : f32 to vector<128x1xf32>
    %43 = arith.divf %41, %42 : vector<128x1xf32>
    %44 = vector.broadcast %43 : vector<128x1xf32> to vector<128x32xf32>
    %45 = arith.subf %39, %44 : vector<128x32xf32>
    %46 = arith.mulf %45, %45 : vector<128x32xf32>
    %cst_16 = arith.constant dense<0.000000e+00> : vector<128xf32>
    %47 = vector.multi_reduction <add>, %46, %cst_16 [1] : vector<128x32xf32> to vector<128xf32>
    %48 = vector.shape_cast %47 : vector<128xf32> to vector<128x1xf32>
    %cst_17 = arith.constant 3.200000e+01 : f32
    %49 = vector.broadcast %cst_17 : f32 to vector<128x1xf32>
    %50 = arith.divf %48, %49 : vector<128x1xf32>
    %cst_18 = arith.constant 9.99999974E-6 : f32
    %51 = vector.broadcast %cst_18 : f32 to vector<128x1xf32>
    %52 = arith.addf %50, %51 : vector<128x1xf32>
    %53 = math.rsqrt %52 : vector<128x1xf32>
    %54 = vector.broadcast %53 : vector<128x1xf32> to vector<128x32xf32>
    %55 = vector.broadcast %5 : vector<1x32xf32> to vector<128x32xf32>
    %56 = arith.mulf %54, %55 : vector<128x32xf32>
    %57 = arith.mulf %45, %56 : vector<128x32xf32>
    %58 = vector.broadcast %6 : vector<1x32xf32> to vector<128x32xf32>
    %59 = arith.addf %57, %58 : vector<128x32xf32>
    %cst_19 = arith.constant 0.000000e+00 : f32
    %60 = vector.broadcast %cst_19 : f32 to vector<128x32xf32>
    %61 = arith.maximumf %59, %60 : vector<128x32xf32>
    %62 = arith.truncf %61 : vector<128x32xf32> to vector<128x32xbf16>
    %c0_20 = arith.constant 0 : index
    %c0_21 = arith.constant 0 : index
    %63 = vector.load %arg4[%c0_20, %c0_21] : memref<32x8xbf16, #tpu.memory_space<vmem>>, vector<32x8xbf16>
    %cst_22 = arith.constant dense<0.000000e+00> : vector<128x8xf32>
    %64 = tpu.matmul %62, %63, %cst_22 {dimension_numbers = #tpu.dot_dimension_numbers<[1], [0], [0], [1], [0, 0, 1, 1], [], []>} : vector<128x32xbf16>, vector<32x8xbf16>, vector<128x8xf32> -> vector<128x8xf32>
    %c0_23 = arith.constant 0 : index
    %c0_24 = arith.constant 0 : index
    %65 = vector.load %arg6[%c0_23, %c0_24] : memref<1x8xf32, #tpu.memory_space<vmem>>, vector<1x8xf32>
    %66 = vector.broadcast %65 : vector<1x8xf32> to vector<128x8xf32>
    %67 = arith.addf %64, %66 : vector<128x8xf32>
    %c0_25 = arith.constant 0 : index
    %c0_26 = arith.constant 0 : index
    %68 = vector.load %arg7[%c0_25, %c0_26] : memref<128x8xf32, #tpu.memory_space<vmem>>, vector<128x8xf32>
    tpu.vector_store %arg7[%c0_25, %c0_26], %67 {strides = array<i32>} : memref<128x8xf32, #tpu.memory_space<vmem>>, vector<128x8xf32>,
    return
  }
  func.func @transform_0(%arg0: i32) -> (i32, i32) {
    %c0_i32 = arith.constant 0 : i32
    %c0_i32_0 = arith.constant 0 : i32
    return %arg0, %c0_i32 : i32, i32
  }
  func.func @transform_1(%arg0: i32) -> (i32, i32) {
    %c0_i32 = arith.constant 0 : i32
    %c0_i32_0 = arith.constant 0 : i32
    %c0_i32_1 = arith.constant 0 : i32
    return %c0_i32, %c0_i32_0 : i32, i32
  }
  func.func @transform_2(%arg0: i32) -> (i32, i32) {
    %c0_i32 = arith.constant 0 : i32
    %c0_i32_0 = arith.constant 0 : i32
    %c0_i32_1 = arith.constant 0 : i32
    return %c0_i32, %c0_i32_0 : i32, i32
  }
  func.func @transform_3(%arg0: i32) -> (i32, i32) {
    %c0_i32 = arith.constant 0 : i32
    %c0_i32_0 = arith.constant 0 : i32
    %c0_i32_1 = arith.constant 0 : i32
    return %c0_i32, %c0_i32_0 : i32, i32
  }
  func.func @transform_4(%arg0: i32) -> (i32, i32) {
    %c0_i32 = arith.constant 0 : i32
    %c0_i32_0 = arith.constant 0 : i32
    %c0_i32_1 = arith.constant 0 : i32
    return %c0_i32, %c0_i32_0 : i32, i32
  }
  func.func @transform_5(%arg0: i32) -> (i32, i32) {
    %c0_i32 = arith.constant 0 : i32
    %c0_i32_0 = arith.constant 0 : i32
    %c0_i32_1 = arith.constant 0 : i32
    return %c0_i32, %c0_i32_0 : i32, i32
  }
  func.func @transform_6(%arg0: i32) -> (i32, i32) {
    %c0_i32 = arith.constant 0 : i32
    %c0_i32_0 = arith.constant 0 : i32
    return %arg0, %c0_i32 : i32, i32
  }
}

</mosaic_0001>

<llo_original>
// kernel: tpu_custom_call.1
$region0: #{tpu_custom_call.1}
  #allocation0 [shape = 'u32[]', space=smem, size = 0x4, offset = 0x4, fixed_abs, tag = 'smem constant byte address 0x4 - core index']
  #allocation1 [shape = 'u32[144,128]{1,0:T(1,128)}', space=vmem, size = 0x12000, scoped, tag = 'internal scratch']
  %s0 = inlined_call_operand.vmem [shape: f32[256,16], index: 0, kind: input, shape index: {}]
  %s1 = inlined_call_operand.vmem [shape: bf16[16,32], index: 1, kind: input, shape index: {}]
  %s2 = inlined_call_operand.vmem [shape: bf16[32,32], index: 2, kind: input, shape index: {}]
  %s3 = inlined_call_operand.vmem [shape: bf16[32,8], index: 3, kind: input, shape index: {}]
  %s4 = inlined_call_operand.vmem [shape: f32[6,32], index: 4, kind: input, shape index: {}]
  %s5 = inlined_call_operand.vmem [shape: f32[1,8], index: 5, kind: input, shape index: {}]
  %s6 = inlined_call_operand.vmem [shape: f32[256,8], index: 6, kind: output, shape index: {}]
  %s7 = sld [smem:[#allocation0]]
  $region57: #{tpu_custom_call.1} parent=0
    _
  %s9 = ssub.s32 1, %s7
  %s10 = scalar_select 0, %s9, %s7
  loop: start=0, step=1, limit=4
  $region2: #{tpu_custom_call.1} parent=0 // loop_pre_header
    _
  $region3: #{tpu_custom_call.1} parent=0 // loop_header
    %s12 = sphi 0, %s16
    %p13 = scmp.ge.s32.totalorder %s12, 4
    %s22 = sphi 0, %s24
    %s25 = sphi 0, %s22
    %s26 = sphi 0, %s25
    %s42 = sphi 0, %s26
    %s46 = sphi 0, %s46
    %s48 = sphi 0, %s46
    %s49 = sphi 0, %s48
    %s63 = sphi 0, %s49
    %s67 = sphi 0, %s67
    %s69 = sphi 0, %s67
    %s70 = sphi 0, %s69
    %s84 = sphi 0, %s70
    %s88 = sphi 0, %s88
    %s90 = sphi 0, %s88
    %s91 = sphi 0, %s90
    %s105 = sphi 0, %s91
    %s109 = sphi 0, %s109
    %s111 = sphi 0, %s109
    %s112 = sphi 0, %s111
    %s126 = sphi 0, %s112
    %s130 = sphi 0, %s130
    %s132 = sphi 0, %s130
    %s133 = sphi 0, %s132
    %s147 = sphi 0, %s133
    %s153 = sphi 0, %s155
    %s156 = sphi 0, %s153
    %s157 = sphi 0, %s156
    %s173 = sphi 0, %s157
  $region4: #{tpu_custom_call.1} parent=0 // loop_header_branch
    %15 = sbr.rel (%p13) target = $region8
  $region5: #{tpu_custom_call.1} parent=0 // loop_body
    %s17 = ssub.s32 %s12, 1
    %s18 = ssub.s32 %s12, 2
    %s19 = sadd.s32 %s12, 1
    %s20 = ssub.s32 %s12, %s19
    %p21 = scmp.eq.s32.totalorder %s20, 0
    %s23 = sadd.s32 %s22, 1
    %s24 = scalar_select %p21, %s22, %s23
    %p27 = pneg %p21
    %p28 = scmp.eq.s32.totalorder %s12, 1
    %p29 = por %p27, %p28
    %p30 = scmp.ne.s32.totalorder %s22, %s25
    %p31 = scmp.eq.s32.totalorder %s12, 0
    %p32 = por %p30, %p31
    %p33 = scmp.ne.s32.totalorder %s22, %s25
    %p34 = scmp.eq.s32.totalorder %s17, 1
    %p35 = por %p33, %p34
    %p36 = scmp.ne.s32.totalorder %s25, %s26
    %p37 = scmp.eq.s32.totalorder %s17, 0
    %p38 = por %p36, %p37
    %p39 = scmp.ne.s32.totalorder %s25, %s26
    %p40 = scmp.eq.s32.totalorder %s18, 1
    %p41 = por %p39, %p40
    %p43 = scmp.ne.s32.totalorder %s26, %s42
    %p44 = scmp.eq.s32.totalorder %s18, 0
    %p45 = por %p43, %p44
    %s47 = sadd.s32 %s46, 1
    %p50 = scmp.eq.s32.totalorder %s12, 1
    %p51 = scmp.ne.s32.totalorder %s46, %s48
    %p52 = scmp.eq.s32.totalorder %s12, 0
    %p53 = por %p51, %p52
    %p54 = scmp.ne.s32.totalorder %s46, %s48
    %p55 = scmp.eq.s32.totalorder %s17, 1
    %p56 = por %p54, %p55
    %p57 = scmp.ne.s32.totalorder %s48, %s49
    %p58 = scmp.eq.s32.totalorder %s17, 0
    %p59 = por %p57, %p58
    %p60 = scmp.ne.s32.totalorder %s48, %s49
    %p61 = scmp.eq.s32.totalorder %s18, 1
    %p62 = por %p60, %p61
    %p64 = scmp.ne.s32.totalorder %s49, %s63
    %p65 = scmp.eq.s32.totalorder %s18, 0
    %p66 = por %p64, %p65
    %s68 = sadd.s32 %s67, 1
    %p71 = scmp.eq.s32.totalorder %s12, 1
    %p72 = scmp.ne.s32.totalorder %s67, %s69
    %p73 = scmp.eq.s32.totalorder %s12, 0
    %p74 = por %p72, %p73
    %p75 = scmp.ne.s32.totalorder %s67, %s69
    %p76 = scmp.eq.s32.totalorder %s17, 1
    %p77 = por %p75, %p76
    %p78 = scmp.ne.s32.totalorder %s69, %s70
    %p79 = scmp.eq.s32.totalorder %s17, 0
    %p80 = por %p78, %p79
    %p81 = scmp.ne.s32.totalorder %s69, %s70
    %p82 = scmp.eq.s32.totalorder %s18, 1
    %p83 = por %p81, %p82
    %p85 = scmp.ne.s32.totalorder %s70, %s84
    %p86 = scmp.eq.s32.totalorder %s18, 0
    %p87 = por %p85, %p86
    %s89 = sadd.s32 %s88, 1
    %p92 = scmp.eq.s32.totalorder %s12, 1
    %p93 = scmp.ne.s32.totalorder %s88, %s90
    %p94 = scmp.eq.s32.totalorder %s12, 0
    %p95 = por %p93, %p94
    %p96 = scmp.ne.s32.totalorder %s88, %s90
    %p97 = scmp.eq.s32.totalorder %s17, 1
    %p98 = por %p96, %p97
    %p99 = scmp.ne.s32.totalorder %s90, %s91
    %p100 = scmp.eq.s32.totalorder %s17, 0
    %p101 = por %p99, %p100
    %p102 = scmp.ne.s32.totalorder %s90, %s91
    %p103 = scmp.eq.s32.totalorder %s18, 1
    %p104 = por %p102, %p103
    %p106 = scmp.ne.s32.totalorder %s91, %s105
    %p107 = scmp.eq.s32.totalorder %s18, 0
    %p108 = por %p106, %p107
    %s110 = sadd.s32 %s109, 1
    %p113 = scmp.eq.s32.totalorder %s12, 1
    %p114 = scmp.ne.s32.totalorder %s109, %s111
    %p115 = scmp.eq.s32.totalorder %s12, 0
    %p116 = por %p114, %p115
    %p117 = scmp.ne.s32.totalorder %s109, %s111
    %p118 = scmp.eq.s32.totalorder %s17, 1
    %p119 = por %p117, %p118
    %p120 = scmp.ne.s32.totalorder %s111, %s112
    %p121 = scmp.eq.s32.totalorder %s17, 0
    %p122 = por %p120, %p121
    %p123 = scmp.ne.s32.totalorder %s111, %s112
    %p124 = scmp.eq.s32.totalorder %s18, 1
    %p125 = por %p123, %p124
    %p127 = scmp.ne.s32.totalorder %s112, %s126
    %p128 = scmp.eq.s32.totalorder %s18, 0
    %p129 = por %p127, %p128
    %s131 = sadd.s32 %s130, 1
    %p134 = scmp.eq.s32.totalorder %s12, 1
    %p135 = scmp.ne.s32.totalorder %s130, %s132
    %p136 = scmp.eq.s32.totalorder %s12, 0
    %p137 = por %p135, %p136
    %p138 = scmp.ne.s32.totalorder %s130, %s132
    %p139 = scmp.eq.s32.totalorder %s17, 1
    %p140 = por %p138, %p139
    %p141 = scmp.ne.s32.totalorder %s132, %s133
    %p142 = scmp.eq.s32.totalorder %s17, 0
    %p143 = por %p141, %p142
    %p144 = scmp.ne.s32.totalorder %s132, %s133
    %p145 = scmp.eq.s32.totalorder %s18, 1
    %p146 = por %p144, %p145
    %p148 = scmp.ne.s32.totalorder %s133, %s147
    %p149 = scmp.eq.s32.totalorder %s18, 0
    %p150 = por %p148, %p149
    %s151 = ssub.s32 %s12, %s19
    %p152 = scmp.eq.s32.totalorder %s151, 0
    %s154 = sadd.s32 %s153, 1
    %s155 = scalar_select %p152, %s153, %s154
    %p158 = pneg %p152
    %p159 = scmp.eq.s32.totalorder %s12, 1
    %p160 = por %p158, %p159
    %p161 = scmp.ne.s32.totalorder %s153, %s156
    %p162 = scmp.eq.s32.totalorder %s12, 0
    %p163 = por %p161, %p162
    %p164 = scmp.ne.s32.totalorder %s153, %s156
    %p165 = scmp.eq.s32.totalorder %s17, 1
    %p166 = por %p164, %p165
    %p167 = scmp.ne.s32.totalorder %s156, %s157
    %p168 = scmp.eq.s32.totalorder %s17, 0
    %p169 = por %p167, %p168
    %p170 = scmp.ne.s32.totalorder %s156, %s157
    %p171 = scmp.eq.s32.totalorder %s18, 1
    %p172 = por %p170, %p171
    %p174 = scmp.ne.s32.totalorder %s157, %s173
    %p175 = scmp.eq.s32.totalorder %s18, 0
    %p176 = por %p174, %p175
    %p177 = scmp.le.s32.totalorder 1, %s12
    %p178 = scmp.lt.s32.totalorder %s12, 3
    %p179 = pnand %p177, %p178
    %p180 = pneg %p179
    // Predicated region
    $region9: #{tpu_custom_call.1} parent=5 // pred_check
      _
    $region10: #{tpu_custom_call.1} parent=5 // pred_check_branch
      %182 = sbr.rel (%p179) target = $region12
    $region11: #{tpu_custom_call.1} parent=5 // pred_region
      %s183 = ssub.s32 %s12, 1
      // Predicated region
      $region13: #{tpu_custom_call.1} parent=11 // pred_check
        %p184 = pneg %p59
      $region14: #{tpu_custom_call.1} parent=11 // pred_check_branch
        %186 = sbr.rel (%p184) target = $region16
      $region15: #{tpu_custom_call.1} parent=11 // pred_region
        _
      $region16: #{tpu_custom_call.1} parent=11 // pred_fallthru
        _
      // Predicated region
      $region17: #{tpu_custom_call.1} parent=11 // pred_check
        %p187 = pneg %p80
      $region18: #{tpu_custom_call.1} parent=11 // pred_check_branch
        %189 = sbr.rel (%p187) target = $region20
      $region19: #{tpu_custom_call.1} parent=11 // pred_region
        _
      $region20: #{tpu_custom_call.1} parent=11 // pred_fallthru
        _
      // Predicated region
      $region21: #{tpu_custom_call.1} parent=11 // pred_check
        %p190 = pneg %p101
      $region22: #{tpu_custom_call.1} parent=11 // pred_check_branch
        %192 = sbr.rel (%p190) target = $region24
      $region23: #{tpu_custom_call.1} parent=11 // pred_region
        _
      $region24: #{tpu_custom_call.1} parent=11 // pred_fallthru
        _
      // Predicated region
      $region25: #{tpu_custom_call.1} parent=11 // pred_check
        %p193 = pneg %p122
      $region26: #{tpu_custom_call.1} parent=11 // pred_check_branch
        %195 = sbr.rel (%p193) target = $region28
      $region27: #{tpu_custom_call.1} parent=11 // pred_region
        _
      $region28: #{tpu_custom_call.1} parent=11 // pred_fallthru
        _
      // Predicated region
      $region29: #{tpu_custom_call.1} parent=11 // pred_check
        %p196 = pneg %p143
      $region30: #{tpu_custom_call.1} parent=11 // pred_check_branch
        %198 = sbr.rel (%p196) target = $region32
      $region31: #{tpu_custom_call.1} parent=11 // pred_region
        _
      $region32: #{tpu_custom_call.1} parent=11 // pred_fallthru
        _
    $region12: #{tpu_custom_call.1} parent=5 // pred_fallthru
      _
    %p199 = scmp.lt.s32.totalorder %s12, 2
    // Predicated region
    $region33: #{tpu_custom_call.1} parent=5 // pred_check
      %p200 = pneg %p199
    $region34: #{tpu_custom_call.1} parent=5 // pred_check_branch
      %202 = sbr.rel (%p200) target = $region36
    $region35: #{tpu_custom_call.1} parent=5 // pred_region
      // Predicated region
      $region37: #{tpu_custom_call.1} parent=35 // pred_check
        %p203 = pneg %p32
      $region38: #{tpu_custom_call.1} parent=35 // pred_check_branch
        %205 = sbr.rel (%p203) target = $region40
      $region39: #{tpu_custom_call.1} parent=35 // pred_region
        %s206 = smul.u32 16, %s12
        %p207 = scmp.lt.s32.totalorder %s206, 31
        %s208 = scalar_select %p207, %s206, 31
        %s209 = smul.addr %s208, 8
        %s210 = scalar_lea.vmem %s0, %s209
        %s211 = smul.u32 16, %s12
      $region40: #{tpu_custom_call.1} parent=35 // pred_fallthru
        _
    $region36: #{tpu_custom_call.1} parent=5 // pred_fallthru
      _
    %p212 = scmp.le.s32.totalorder 1, %s12
    %p213 = scmp.lt.s32.totalorder %s12, 3
    %p214 = pnand %p212, %p213
    %p215 = pneg %p214
    // Predicated region
    $region41: #{tpu_custom_call.1} parent=5 // pred_check
      _
    $region42: #{tpu_custom_call.1} parent=5 // pred_check_branch
      %217 = sbr.rel (%p214) target = $region44
    $region43: #{tpu_custom_call.1} parent=5 // pred_region
      %s218 = ssub.s32 %s12, 1
      %s219 = smul.u32 16, %s17
      %p220 = scmp.lt.s32.totalorder %s219, 31
      %s221 = scalar_select %p220, %s219, 31
      %s222 = smul.addr %s221, 8
      %s223 = scalar_lea.vmem %s0, %s222
      %p224 = pneg %p38
      %p225 = pneg %p35
      %p226 = pneg %p59
      %p227 = pneg %p56
      %p228 = pneg %p80
      %p229 = pneg %p77
      %p230 = pneg %p101
      %p231 = pneg %p98
      %p232 = pneg %p122
      %p233 = pneg %p119
      %p234 = pneg %p143
      %p235 = pneg %p140
      %p236 = pneg %p169
      %p237 = pneg %p166
      %s238 = smul.u32 16, %s17
      %p239 = scmp.lt.s32.totalorder %s238, 31
      %s240 = scalar_select %p239, %s238, 31
      %s241 = smul.addr %s240, 8
      %s242 = scalar_lea.vmem %s6, %s241
      %s243 = smul.u32 16, %s17
      %p244 = scmp.lt.s32.totalorder %s243, 31
      %s245 = scalar_select %p244, %s243, 31
      %s246 = smul.addr %s245, 8
      %s247 = scalar_lea.vmem %s0, %s246
      %s248 = smul.u32 16, %s17
      %s249 = smul.u32 16, %s17
      %p250 = scmp.lt.s32.totalorder %s249, 31
      %s251 = scalar_select %p250, %s249, 31
      %s252 = smul.addr %s251, 8
      %s253 = scalar_lea.vmem %s6, %s252
      %s254 = smul.u32 16, %s17
      %v256 = vld [vmem:[%s4] sm:$0x3f]
      %v257 = vld [vmem:[%s247] sm:$0xff]
      %v258 = vld [vmem:[%s247 + $0x8] sm:$0xff]
      %v259 = vld [vmem:[%s247 + $0x10] sm:$0xff]
      %v260 = vld [vmem:[%s247 + $0x18] sm:$0xff]
      %v261 = vld [vmem:[%s247 + $0x20] sm:$0xff]
      %v262 = vld [vmem:[%s247 + $0x28] sm:$0xff]
      %v263 = vld [vmem:[%s247 + $0x30] sm:$0xff]
      %v264 = vld [vmem:[%s247 + $0x38] sm:$0xff]
      %v265 = vld [vmem:[%s247 + $0x40] sm:$0xff]
      %v266 = vld [vmem:[%s247 + $0x48] sm:$0xff]
      %v267 = vld [vmem:[%s247 + $0x50] sm:$0xff]
      %v268 = vld [vmem:[%s247 + $0x58] sm:$0xff]
      %v269 = vld [vmem:[%s247 + $0x60] sm:$0xff]
      %v270 = vld [vmem:[%s247 + $0x68] sm:$0xff]
      %v271 = vld [vmem:[%s247 + $0x70] sm:$0xff]
      %v272 = vld [vmem:[%s247 + $0x78] sm:$0xff]
      %v273 = vpack.c.bf16 %v258, %v257
      %v274 = vpack.c.bf16 %v260, %v259
      %v275 = vpack.c.bf16 %v262, %v261
      %v276 = vpack.c.bf16 %v264, %v263
      %v277 = vpack.c.bf16 %v266, %v265
      %v278 = vpack.c.bf16 %v268, %v267
      %v279 = vpack.c.bf16 %v270, %v269
      %v280 = vpack.c.bf16 %v272, %v271
      %v281 = vld [vmem:[%s1] sm:$0xf]
      %v282 = vld [vmem:[%s1 + $0x4] sm:$0xf]
      %v283 = vlaneseq
      %v284 = vshrl.u32 %v283, 7
      %v285 = vsub.s32 0, %v284
      %v286 = vrot.slane %v256, %v285
      %v289 = vunpack.c.l.b16 %v281
      %v290 = vunpack.c.l.b16 %v282
      %v291 = vpack.c.b16 %v290, %v289
      %vm293 = vcmask 130048
      %v295 = vsel %vm293, %v273, 0
      %v298 = vsel %vm293, %v274, 0
      %v301 = vsel %vm293, %v275, 0
      %v304 = vsel %vm293, %v276, 0
      %v307 = vsel %vm293, %v277, 0
      %v310 = vsel %vm293, %v278, 0
      %v313 = vsel %vm293, %v279, 0
      %v316 = vsel %vm293, %v280, 0
      %318 = vmatprep.subr.bf16.mxu0 0
      %319 = vmatpush1.bf16.msra.mxu0 %v291
      %320 = vmatprep.subr.bf16.mxu0 0
      %321 = vmatpush1.bf16.msra.mxu0 0
      %322 = vmatprep.subr.bf16.mxu0 0
      %323 = vmatpush1.bf16.msra.mxu0 0
      %324 = vmatprep.subr.bf16.mxu0 0
      %325 = vmatpush1.bf16.msra.mxu0 0
      %326 = vmatprep.subr.bf16.mxu0 0
      %327 = vmatpush1.bf16.msra.mxu0 0
      %328 = vmatprep.subr.bf16.mxu0 0
      %329 = vmatpush1.bf16.msra.mxu0 0
      %330 = vmatprep.subr.bf16.mxu0 0
      %331 = vmatpush1.bf16.msra.mxu0 0
      %332 = vmatprep.subr.bf16.mxu0 0
      %333 = vmatpush1.bf16.msra.mxu0 0
      %334 = vmatprep.subr.bf16.mxu0 0
      %335 = vmatpush1.bf16.msra.mxu0 0
      %336 = vmatprep.subr.bf16.mxu0 0
      %337 = vmatpush1.bf16.msra.mxu0 0
      %338 = vmatprep.subr.bf16.mxu0 0
      %339 = vmatpush1.bf16.msra.mxu0 0
      %340 = vmatprep.subr.bf16.mxu0 0
      %341 = vmatpush1.bf16.msra.mxu0 0
      %342 = vmatprep.subr.bf16.mxu0 0
      %343 = vmatpush1.bf16.msra.mxu0 0
      %344 = vmatprep.subr.bf16.mxu0 0
      %345 = vmatpush1.bf16.msra.mxu0 0
      %346 = vmatprep.subr.bf16.mxu0 0
      %347 = vmatpush1.bf16.msra.mxu0 0
      %348 = vmatprep.subr.bf16.mxu0 0
      %349 = vmatpush1.bf16.msra.mxu0 0
      %350 = vmatprep.mubr.bf16.mxu0 0
      %351 = vmatmul.mubr.bf16.gmra.mrb[0].mxu0 %v295
      %v352 = vpop.f32.mrb[0].mxu0
      %v353 = vadd.f32 %v286, %v352
      %v354 = vpop.f32.mrb[0].mxu0
      %v355 = vpop.f32.mrb[0].mxu0
      %v356 = vadd.f32 %v286, %v355
      %v357 = vpop.f32.mrb[0].mxu0
      %358 = vmatprep.mubr.bf16.mxu0 0
      %359 = vmatmul.mubr.bf16.gmra.mrb[0].mxu0 %v298
      %v360 = vpop.f32.mrb[0].mxu0
      %v361 = vadd.f32 %v286, %v360
      %v362 = vpop.f32.mrb[0].mxu0
      %v363 = vpop.f32.mrb[0].mxu0
      %v364 = vadd.f32 %v286, %v363
      %v365 = vpop.f32.mrb[0].mxu0
      %366 = vmatprep.mubr.bf16.mxu0 0
      %367 = vmatmul.mubr.bf16.gmra.mrb[0].mxu0 %v301
      %v368 = vpop.f32.mrb[0].mxu0
      %v369 = vadd.f32 %v286, %v368
      %v370 = vpop.f32.mrb[0].mxu0
      %v371 = vpop.f32.mrb[0].mxu0
      %v372 = vadd.f32 %v286, %v371
      %v373 = vpop.f32.mrb[0].mxu0
      %374 = vmatprep.mubr.bf16.mxu0 0
      %375 = vmatmul.mubr.bf16.gmra.mrb[0].mxu0 %v304
      %v376 = vpop.f32.mrb[0].mxu0
      %v377 = vadd.f32 %v286, %v376
      %v378 = vpop.f32.mrb[0].mxu0
      %v379 = vpop.f32.mrb[0].mxu0
      %v380 = vadd.f32 %v286, %v379
      %v381 = vpop.f32.mrb[0].mxu0
      %382 = vmatprep.mubr.bf16.mxu0 0
      %383 = vmatmul.mubr.bf16.gmra.mrb[0].mxu0 %v307
      %v384 = vpop.f32.mrb[0].mxu0
      %v385 = vadd.f32 %v286, %v384
      %v386 = vpop.f32.mrb[0].mxu0
      %v387 = vpop.f32.mrb[0].mxu0
      %v388 = vadd.f32 %v286, %v387
      %v389 = vpop.f32.mrb[0].mxu0
      %390 = vmatprep.mubr.bf16.mxu0 0
      %391 = vmatmul.mubr.bf16.gmra.mrb[0].mxu0 %v310
      %v392 = vpop.f32.mrb[0].mxu0
      %v393 = vadd.f32 %v286, %v392
      %v394 = vpop.f32.mrb[0].mxu0
      %v395 = vpop.f32.mrb[0].mxu0
      %v396 = vadd.f32 %v286, %v395
      %v397 = vpop.f32.mrb[0].mxu0
      %398 = vmatprep.mubr.bf16.mxu0 0
      %399 = vmatmul.mubr.bf16.gmra.mrb[0].mxu0 %v313
      %v400 = vpop.f32.mrb[0].mxu0
      %v401 = vadd.f32 %v286, %v400
      %v402 = vpop.f32.mrb[0].mxu0
      %v403 = vpop.f32.mrb[0].mxu0
      %v404 = vadd.f32 %v286, %v403
      %v405 = vpop.f32.mrb[0].mxu0
      %406 = vmatprep.mubr.bf16.mxu0 0
      %407 = vmatmul.mubr.bf16.gmra.mrb[0].mxu0 %v316
      %v408 = vpop.f32.mrb[0].mxu0
      %v409 = vadd.f32 %v286, %v408
      %v410 = vpop.f32.mrb[0].mxu0
      %v411 = vpop.f32.mrb[0].mxu0
      %v412 = vadd.f32 %v286, %v411
      %v413 = vpop.f32.mrb[0].mxu0
      %414 = vdwg.mxu0
      %vm415 = vcmask 261120
      %v416 = vsel %vm415, %v353, 0.0
      %417 = vadd.xlane.f32.xlu0 %v416
      %v418 = vpop.xlane.xlu0 %417
      %v419 = vsel %vm415, %v356, 0.0
      %420 = vadd.xlane.f32.xlu0 %v419
      %v421 = vpop.xlane.xlu0 %420
      %v422 = vsel %vm415, %v361, 0.0
      %423 = vadd.xlane.f32.xlu0 %v422
      %v424 = vpop.xlane.xlu0 %423
      %v425 = vsel %vm415, %v364, 0.0
      %426 = vadd.xlane.f32.xlu0 %v425
      %v427 = vpop.xlane.xlu0 %426
      %v428 = vsel %vm415, %v369, 0.0
      %429 = vadd.xlane.f32.xlu0 %v428
      %v430 = vpop.xlane.xlu0 %429
      %v431 = vsel %vm415, %v372, 0.0
      %432 = vadd.xlane.f32.xlu0 %v431
      %v433 = vpop.xlane.xlu0 %432
      %v434 = vsel %vm415, %v377, 0.0
      %435 = vadd.xlane.f32.xlu0 %v434
      %v436 = vpop.xlane.xlu0 %435
      %v437 = vsel %vm415, %v380, 0.0
      %438 = vadd.xlane.f32.xlu0 %v437
      %v439 = vpop.xlane.xlu0 %438
      %v440 = vsel %vm415, %v385, 0.0
      %441 = vadd.xlane.f32.xlu0 %v440
      %v442 = vpop.xlane.xlu0 %441
      %v443 = vsel %vm415, %v388, 0.0
      %444 = vadd.xlane.f32.xlu0 %v443
      %v445 = vpop.xlane.xlu0 %444
      %v446 = vsel %vm415, %v393, 0.0
      %447 = vadd.xlane.f32.xlu0 %v446
      %v448 = vpop.xlane.xlu0 %447
      %v449 = vsel %vm415, %v396, 0.0
      %450 = vadd.xlane.f32.xlu0 %v449
      %v451 = vpop.xlane.xlu0 %450
      %v452 = vsel %vm415, %v401, 0.0
      %453 = vadd.xlane.f32.xlu0 %v452
      %v454 = vpop.xlane.xlu0 %453
      %v455 = vsel %vm415, %v404, 0.0
      %456 = vadd.xlane.f32.xlu0 %v455
      %v457 = vpop.xlane.xlu0 %456
      %v458 = vsel %vm415, %v409, 0.0
      %459 = vadd.xlane.f32.xlu0 %v458
      %v460 = vpop.xlane.xlu0 %459
      %v461 = vsel %vm415, %v412, 0.0
      %462 = vadd.xlane.f32.xlu0 %v461
      %v463 = vpop.xlane.xlu0 %462
      %v464 = vrcp.pop 32.0
      %v465 = vmul.f32 %v418, %v464
      %v466 = vmul.f32 %v421, %v464
      %v467 = vmul.f32 %v424, %v464
      %v468 = vmul.f32 %v427, %v464
      %v469 = vmul.f32 %v430, %v464
      %v470 = vmul.f32 %v433, %v464
      %v471 = vmul.f32 %v436, %v464
      %v472 = vmul.f32 %v439, %v464
      %v473 = vmul.f32 %v442, %v464
      %v474 = vmul.f32 %v445, %v464
      %v475 = vmul.f32 %v448, %v464
      %v476 = vmul.f32 %v451, %v464
      %v477 = vmul.f32 %v454, %v464
      %v478 = vmul.f32 %v457, %v464
      %v479 = vmul.f32 %v460, %v464
      %v480 = vmul.f32 %v463, %v464
      %v481 = vsub.f32 %v353, %v465
      %v482 = vsub.f32 %v356, %v466
      %v483 = vsub.f32 %v361, %v467
      %v484 = vsub.f32 %v364, %v468
      %v485 = vsub.f32 %v369, %v469
      %v486 = vsub.f32 %v372, %v470
      %v487 = vsub.f32 %v377, %v471
      %v488 = vsub.f32 %v380, %v472
      %v489 = vsub.f32 %v385, %v473
      %v490 = vsub.f32 %v388, %v474
      %v491 = vsub.f32 %v393, %v475
      %v492 = vsub.f32 %v396, %v476
      %v493 = vsub.f32 %v401, %v477
      %v494 = vsub.f32 %v404, %v478
      %v495 = vsub.f32 %v409, %v479
      %v496 = vsub.f32 %v412, %v480
      %v497 = vmul.f32 %v481, %v481
      %v498 = vmul.f32 %v482, %v482
      %v499 = vmul.f32 %v483, %v483
      %v500 = vmul.f32 %v484, %v484
      %v501 = vmul.f32 %v485, %v485
      %v502 = vmul.f32 %v486, %v486
      %v503 = vmul.f32 %v487, %v487
      %v504 = vmul.f32 %v488, %v488
      %v505 = vmul.f32 %v489, %v489
      %v506 = vmul.f32 %v490, %v490
      %v507 = vmul.f32 %v491, %v491
      %v508 = vmul.f32 %v492, %v492
      %v509 = vmul.f32 %v493, %v493
      %v510 = vmul.f32 %v494, %v494
      %v511 = vmul.f32 %v495, %v495
      %v512 = vmul.f32 %v496, %v496
      %v513 = vsel %vm415, %v497, 0.0
      %514 = vadd.xlane.f32.xlu0 %v513
      %v515 = vpop.xlane.xlu0 %514
      %v516 = vsel %vm415, %v498, 0.0
      %517 = vadd.xlane.f32.xlu0 %v516
      %v518 = vpop.xlane.xlu0 %517
      %v519 = vsel %vm415, %v499, 0.0
      %520 = vadd.xlane.f32.xlu0 %v519
      %v521 = vpop.xlane.xlu0 %520
      %v522 = vsel %vm415, %v500, 0.0
      %523 = vadd.xlane.f32.xlu0 %v522
      %v524 = vpop.xlane.xlu0 %523
      %v525 = vsel %vm415, %v501, 0.0
      %526 = vadd.xlane.f32.xlu0 %v525
      %v527 = vpop.xlane.xlu0 %526
      %v528 = vsel %vm415, %v502, 0.0
      %529 = vadd.xlane.f32.xlu0 %v528
      %v530 = vpop.xlane.xlu0 %529
      %v531 = vsel %vm415, %v503, 0.0
      %532 = vadd.xlane.f32.xlu0 %v531
      %v533 = vpop.xlane.xlu0 %532
      %v534 = vsel %vm415, %v504, 0.0
      %535 = vadd.xlane.f32.xlu0 %v534
      %v536 = vpop.xlane.xlu0 %535
      %v537 = vsel %vm415, %v505, 0.0
      %538 = vadd.xlane.f32.xlu0 %v537
      %v539 = vpop.xlane.xlu0 %538
      %v540 = vsel %vm415, %v506, 0.0
      %541 = vadd.xlane.f32.xlu0 %v540
      %v542 = vpop.xlane.xlu0 %541
      %v543 = vsel %vm415, %v507, 0.0
      %544 = vadd.xlane.f32.xlu0 %v543
      %v545 = vpop.xlane.xlu0 %544
      %v546 = vsel %vm415, %v508, 0.0
      %547 = vadd.xlane.f32.xlu0 %v546
      %v548 = vpop.xlane.xlu0 %547
      %v549 = vsel %vm415, %v509, 0.0
      %550 = vadd.xlane.f32.xlu0 %v549
      %v551 = vpop.xlane.xlu0 %550
      %v552 = vsel %vm415, %v510, 0.0
      %553 = vadd.xlane.f32.xlu0 %v552
      %v554 = vpop.xlane.xlu0 %553
      %v555 = vsel %vm415, %v511, 0.0
      %556 = vadd.xlane.f32.xlu0 %v555
      %v557 = vpop.xlane.xlu0 %556
      %v558 = vsel %vm415, %v512, 0.0
      %559 = vadd.xlane.f32.xlu0 %v558
      %v560 = vpop.xlane.xlu0 %559
      %v561 = vmul.f32 %v515, %v464
      %v562 = vmul.f32 %v518, %v464
      %v563 = vmul.f32 %v521, %v464
      %v564 = vmul.f32 %v524, %v464
      %v565 = vmul.f32 %v527, %v464
      %v566 = vmul.f32 %v530, %v464
      %v567 = vmul.f32 %v533, %v464
      %v568 = vmul.f32 %v536, %v464
      %v569 = vmul.f32 %v539, %v464
      %v570 = vmul.f32 %v542, %v464
      %v571 = vmul.f32 %v545, %v464
      %v572 = vmul.f32 %v548, %v464
      %v573 = vmul.f32 %v551, %v464
      %v574 = vmul.f32 %v554, %v464
      %v575 = vmul.f32 %v557, %v464
      %v576 = vmul.f32 %v560, %v464
      %v577 = vadd.f32 %v561, 1e-05
      %v578 = vadd.f32 %v562, 1e-05
      %v579 = vadd.f32 %v563, 1e-05
      %v580 = vadd.f32 %v564, 1e-05
      %v581 = vadd.f32 %v565, 1e-05
      %v582 = vadd.f32 %v566, 1e-05
      %v583 = vadd.f32 %v567, 1e-05
      %v584 = vadd.f32 %v568, 1e-05
      %v585 = vadd.f32 %v569, 1e-05
      %v586 = vadd.f32 %v570, 1e-05
      %v587 = vadd.f32 %v571, 1e-05
      %v588 = vadd.f32 %v572, 1e-05
      %v589 = vadd.f32 %v573, 1e-05
      %v590 = vadd.f32 %v574, 1e-05
      %v591 = vadd.f32 %v575, 1e-05
      %v592 = vadd.f32 %v576, 1e-05
      %v593 = vrsqrt.pop %v577
      %v594 = vrsqrt.pop %v578
      %v595 = vrsqrt.pop %v579
      %v596 = vrsqrt.pop %v580
      %v597 = vrsqrt.pop %v581
      %v598 = vrsqrt.pop %v582
      %v599 = vrsqrt.pop %v583
      %v600 = vrsqrt.pop %v584
      %v601 = vrsqrt.pop %v585
      %v602 = vrsqrt.pop %v586
      %v603 = vrsqrt.pop %v587
      %v604 = vrsqrt.pop %v588
      %v605 = vrsqrt.pop %v589
      %v606 = vrsqrt.pop %v590
      %v607 = vrsqrt.pop %v591
      %v608 = vrsqrt.pop %v592
      %v609 = vlaneseq
      %v610 = vshrl.u32 %v609, 7
      %v611 = vsub.s32 1, %v610
      %v612 = vrot.slane %v256, %v611
      %v613 = vmul.f32 %v593, %v612
      %v614 = vmul.f32 %v594, %v612
      %v615 = vmul.f32 %v595, %v612
      %v616 = vmul.f32 %v596, %v612
      %v617 = vmul.f32 %v597, %v612
      %v618 = vmul.f32 %v598, %v612
      %v619 = vmul.f32 %v599, %v612
      %v620 = vmul.f32 %v600, %v612
      %v621 = vmul.f32 %v601, %v612
      %v622 = vmul.f32 %v602, %v612
      %v623 = vmul.f32 %v603, %v612
      %v624 = vmul.f32 %v604, %v612
      %v625 = vmul.f32 %v605, %v612
      %v626 = vmul.f32 %v606, %v612
      %v627 = vmul.f32 %v607, %v612
      %v628 = vmul.f32 %v608, %v612
      %v629 = vmul.f32 %v481, %v613
      %v630 = vmul.f32 %v482, %v614
      %v631 = vmul.f32 %v483, %v615
      %v632 = vmul.f32 %v484, %v616
      %v633 = vmul.f32 %v485, %v617
      %v634 = vmul.f32 %v486, %v618
      %v635 = vmul.f32 %v487, %v619
      %v636 = vmul.f32 %v488, %v620
      %v637 = vmul.f32 %v489, %v621
      %v638 = vmul.f32 %v490, %v622
      %v639 = vmul.f32 %v491, %v623
      %v640 = vmul.f32 %v492, %v624
      %v641 = vmul.f32 %v493, %v625
      %v642 = vmul.f32 %v494, %v626
      %v643 = vmul.f32 %v495, %v627
      %v644 = vmul.f32 %v496, %v628
      %v645 = vlaneseq
      %v646 = vshrl.u32 %v645, 7
      %v647 = vsub.s32 2, %v646
      %v648 = vrot.slane %v256, %v647
      %v649 = vadd.f32 %v629, %v648
      %v650 = vadd.f32 %v630, %v648
      %v651 = vadd.f32 %v631, %v648
      %v652 = vadd.f32 %v632, %v648
      %v653 = vadd.f32 %v633, %v648
      %v654 = vadd.f32 %v634, %v648
      %v655 = vadd.f32 %v635, %v648
      %v656 = vadd.f32 %v636, %v648
      %v657 = vadd.f32 %v637, %v648
      %v658 = vadd.f32 %v638, %v648
      %v659 = vadd.f32 %v639, %v648
      %v660 = vadd.f32 %v640, %v648
      %v661 = vadd.f32 %v641, %v648
      %v662 = vadd.f32 %v642, %v648
      %v663 = vadd.f32 %v643, %v648
      %v664 = vadd.f32 %v644, %v648
      %v665 = vmax.f32 %v649, 0.0
      %v666 = vmax.f32 %v650, 0.0
      %v667 = vmax.f32 %v651, 0.0
      %v668 = vmax.f32 %v652, 0.0
      %v669 = vmax.f32 %v653, 0.0
      %v670 = vmax.f32 %v654, 0.0
      %v671 = vmax.f32 %v655, 0.0
      %v672 = vmax.f32 %v656, 0.0
      %v673 = vmax.f32 %v657, 0.0
      %v674 = vmax.f32 %v658, 0.0
      %v675 = vmax.f32 %v659, 0.0
      %v676 = vmax.f32 %v660, 0.0
      %v677 = vmax.f32 %v661, 0.0
      %v678 = vmax.f32 %v662, 0.0
      %v679 = vmax.f32 %v663, 0.0
      %v680 = vmax.f32 %v664, 0.0
      %v681 = vpack.c.bf16 %v666, %v665
      %v682 = vpack.c.bf16 %v668, %v667
      %v683 = vpack.c.bf16 %v670, %v669
      %v684 = vpack.c.bf16 %v672, %v671
      %v685 = vpack.c.bf16 %v674, %v673
      %v686 = vpack.c.bf16 %v676, %v675
      %v687 = vpack.c.bf16 %v678, %v677
      %v688 = vpack.c.bf16 %v680, %v679
      %v689 = vld [vmem:[%s2] sm:$0xf]
      %v690 = vld [vmem:[%s2 + $0x4] sm:$0xf]
      %v691 = vld [vmem:[%s2 + $0x8] sm:$0xf]
      %v692 = vld [vmem:[%s2 + $0xc] sm:$0xf]
      %v693 = vlaneseq
      %v694 = vshrl.u32 %v693, 7
      %v695 = vsub.s32 3, %v694
      %v696 = vrot.slane %v256, %v695
      %v701 = vunpack.c.l.b16 %v689
      %v702 = vunpack.c.l.b16 %v690
      %v703 = vunpack.c.l.b16 %v691
      %v704 = vunpack.c.l.b16 %v692
      %v705 = vpack.c.b16 %v702, %v701
      %v706 = vpack.c.b16 %v704, %v703
      %v710 = vsel %vm415, %v681, 0
      %v713 = vsel %vm415, %v682, 0
      %v716 = vsel %vm415, %v683, 0
      %v719 = vsel %vm415, %v684, 0
      %v722 = vsel %vm415, %v685, 0
      %v725 = vsel %vm415, %v686, 0
      %v728 = vsel %vm415, %v687, 0
      %v731 = vsel %vm415, %v688, 0
      %733 = vmatprep.subr.bf16.mxu0 0
      %734 = vmatpush1.bf16.msra.mxu0 %v705
      %735 = vmatprep.subr.bf16.mxu0 0
      %736 = vmatpush1.bf16.msra.mxu0 %v706
      %737 = vmatprep.subr.bf16.mxu0 0
      %738 = vmatpush1.bf16.msra.mxu0 0
      %739 = vmatprep.subr.bf16.mxu0 0
      %740 = vmatpush1.bf16.msra.mxu0 0
      %741 = vmatprep.subr.bf16.mxu0 0
      %742 = vmatpush1.bf16.msra.mxu0 0
      %743 = vmatprep.subr.bf16.mxu0 0
      %744 = vmatpush1.bf16.msra.mxu0 0
      %745 = vmatprep.subr.bf16.mxu0 0
      %746 = vmatpush1.bf16.msra.mxu0 0
      %747 = vmatprep.subr.bf16.mxu0 0
      %748 = vmatpush1.bf16.msra.mxu0 0
      %749 = vmatprep.subr.bf16.mxu0 0
      %750 = vmatpush1.bf16.msra.mxu0 0
      %751 = vmatprep.subr.bf16.mxu0 0
      %752 = vmatpush1.bf16.msra.mxu0 0
      %753 = vmatprep.subr.bf16.mxu0 0
      %754 = vmatpush1.bf16.msra.mxu0 0
      %755 = vmatprep.subr.bf16.mxu0 0
      %756 = vmatpush1.bf16.msra.mxu0 0
      %757 = vmatprep.subr.bf16.mxu0 0
      %758 = vmatpush1.bf16.msra.mxu0 0
      %759 = vmatprep.subr.bf16.mxu0 0
      %760 = vmatpush1.bf16.msra.mxu0 0
      %761 = vmatprep.subr.bf16.mxu0 0
      %762 = vmatpush1.bf16.msra.mxu0 0
      %763 = vmatprep.subr.bf16.mxu0 0
      %764 = vmatpush1.bf16.msra.mxu0 0
      %765 = vmatprep.mubr.bf16.mxu0 0
      %766 = vmatmul.mubr.bf16.gmra.mrb[0].mxu0 %v710
      %v767 = vpop.f32.mrb[0].mxu0
      %v768 = vadd.f32 %v696, %v767
      %v769 = vpop.f32.mrb[0].mxu0
      %v770 = vpop.f32.mrb[0].mxu0
      %v771 = vadd.f32 %v696, %v770
      %v772 = vpop.f32.mrb[0].mxu0
      %773 = vmatprep.mubr.bf16.mxu0 0
      %774 = vmatmul.mubr.bf16.gmra.mrb[0].mxu0 %v713
      %v775 = vpop.f32.mrb[0].mxu0
      %v776 = vadd.f32 %v696, %v775
      %v777 = vpop.f32.mrb[0].mxu0
      %v778 = vpop.f32.mrb[0].mxu0
      %v779 = vadd.f32 %v696, %v778
      %v780 = vpop.f32.mrb[0].mxu0
      %781 = vmatprep.mubr.bf16.mxu0 0
      %782 = vmatmul.mubr.bf16.gmra.mrb[0].mxu0 %v716
      %v783 = vpop.f32.mrb[0].mxu0
      %v784 = vadd.f32 %v696, %v783
      %v785 = vpop.f32.mrb[0].mxu0
      %v786 = vpop.f32.mrb[0].mxu0
      %v787 = vadd.f32 %v696, %v786
      %v788 = vpop.f32.mrb[0].mxu0
      %789 = vmatprep.mubr.bf16.mxu0 0
      %790 = vmatmul.mubr.bf16.gmra.mrb[0].mxu0 %v719
      %v791 = vpop.f32.mrb[0].mxu0
      %v792 = vadd.f32 %v696, %v791
      %v793 = vpop.f32.mrb[0].mxu0
      %v794 = vpop.f32.mrb[0].mxu0
      %v795 = vadd.f32 %v696, %v794
      %v796 = vpop.f32.mrb[0].mxu0
      %797 = vmatprep.mubr.bf16.mxu0 0
      %798 = vmatmul.mubr.bf16.gmra.mrb[0].mxu0 %v722
      %v799 = vpop.f32.mrb[0].mxu0
      %v800 = vadd.f32 %v696, %v799
      %v801 = vpop.f32.mrb[0].mxu0
      %v802 = vpop.f32.mrb[0].mxu0
      %v803 = vadd.f32 %v696, %v802
      %v804 = vpop.f32.mrb[0].mxu0
      %805 = vmatprep.mubr.bf16.mxu0 0
      %806 = vmatmul.mubr.bf16.gmra.mrb[0].mxu0 %v725
      %v807 = vpop.f32.mrb[0].mxu0
      %v808 = vadd.f32 %v696, %v807
      %v809 = vpop.f32.mrb[0].mxu0
      %v810 = vpop.f32.mrb[0].mxu0
      %v811 = vadd.f32 %v696, %v810
      %v812 = vpop.f32.mrb[0].mxu0
      %813 = vmatprep.mubr.bf16.mxu0 0
      %814 = vmatmul.mubr.bf16.gmra.mrb[0].mxu0 %v728
      %v815 = vpop.f32.mrb[0].mxu0
      %v816 = vadd.f32 %v696, %v815
      %v817 = vpop.f32.mrb[0].mxu0
      %v818 = vpop.f32.mrb[0].mxu0
      %v819 = vadd.f32 %v696, %v818
      %v820 = vpop.f32.mrb[0].mxu0
      %821 = vmatprep.mubr.bf16.mxu0 0
      %822 = vmatmul.mubr.bf16.gmra.mrb[0].mxu0 %v731
      %v823 = vpop.f32.mrb[0].mxu0
      %v824 = vadd.f32 %v696, %v823
      %v825 = vpop.f32.mrb[0].mxu0
      %v826 = vpop.f32.mrb[0].mxu0
      %v827 = vadd.f32 %v696, %v826
      %v828 = vpop.f32.mrb[0].mxu0
      %829 = vdwg.mxu0
      %v830 = vsel %vm415, %v768, 0.0
      %831 = vadd.xlane.f32.xlu0 %v830
      %v832 = vpop.xlane.xlu0 %831
      %v833 = vsel %vm415, %v771, 0.0
      %834 = vadd.xlane.f32.xlu0 %v833
      %v835 = vpop.xlane.xlu0 %834
      %v836 = vsel %vm415, %v776, 0.0
      %837 = vadd.xlane.f32.xlu0 %v836
      %v838 = vpop.xlane.xlu0 %837
      %v839 = vsel %vm415, %v779, 0.0
      %840 = vadd.xlane.f32.xlu0 %v839
      %v841 = vpop.xlane.xlu0 %840
      %v842 = vsel %vm415, %v784, 0.0
      %843 = vadd.xlane.f32.xlu0 %v842
      %v844 = vpop.xlane.xlu0 %843
      %v845 = vsel %vm415, %v787, 0.0
      %846 = vadd.xlane.f32.xlu0 %v845
      %v847 = vpop.xlane.xlu0 %846
      %v848 = vsel %vm415, %v792, 0.0
      %849 = vadd.xlane.f32.xlu0 %v848
      %v850 = vpop.xlane.xlu0 %849
      %v851 = vsel %vm415, %v795, 0.0
      %852 = vadd.xlane.f32.xlu0 %v851
      %v853 = vpop.xlane.xlu0 %852
      %v854 = vsel %vm415, %v800, 0.0
      %855 = vadd.xlane.f32.xlu0 %v854
      %v856 = vpop.xlane.xlu0 %855
      %v857 = vsel %vm415, %v803, 0.0
      %858 = vadd.xlane.f32.xlu0 %v857
      %v859 = vpop.xlane.xlu0 %858
      %v860 = vsel %vm415, %v808, 0.0
      %861 = vadd.xlane.f32.xlu0 %v860
      %v862 = vpop.xlane.xlu0 %861
      %v863 = vsel %vm415, %v811, 0.0
      %864 = vadd.xlane.f32.xlu0 %v863
      %v865 = vpop.xlane.xlu0 %864
      %v866 = vsel %vm415, %v816, 0.0
      %867 = vadd.xlane.f32.xlu0 %v866
      %v868 = vpop.xlane.xlu0 %867
      %v869 = vsel %vm415, %v819, 0.0
      %870 = vadd.xlane.f32.xlu0 %v869
      %v871 = vpop.xlane.xlu0 %870
      %v872 = vsel %vm415, %v824, 0.0
      %873 = vadd.xlane.f32.xlu0 %v872
      %v874 = vpop.xlane.xlu0 %873
      %v875 = vsel %vm415, %v827, 0.0
      %876 = vadd.xlane.f32.xlu0 %v875
      %v877 = vpop.xlane.xlu0 %876
      %v878 = vmul.f32 %v832, %v464
      %v879 = vmul.f32 %v835, %v464
      %v880 = vmul.f32 %v838, %v464
      %v881 = vmul.f32 %v841, %v464
      %v882 = vmul.f32 %v844, %v464
      %v883 = vmul.f32 %v847, %v464
      %v884 = vmul.f32 %v850, %v464
      %v885 = vmul.f32 %v853, %v464
      %v886 = vmul.f32 %v856, %v464
      %v887 = vmul.f32 %v859, %v464
      %v888 = vmul.f32 %v862, %v464
      %v889 = vmul.f32 %v865, %v464
      %v890 = vmul.f32 %v868, %v464
      %v891 = vmul.f32 %v871, %v464
      %v892 = vmul.f32 %v874, %v464
      %v893 = vmul.f32 %v877, %v464
      %v894 = vsub.f32 %v768, %v878
      %v895 = vsub.f32 %v771, %v879
      %v896 = vsub.f32 %v776, %v880
      %v897 = vsub.f32 %v779, %v881
      %v898 = vsub.f32 %v784, %v882
      %v899 = vsub.f32 %v787, %v883
      %v900 = vsub.f32 %v792, %v884
      %v901 = vsub.f32 %v795, %v885
      %v902 = vsub.f32 %v800, %v886
      %v903 = vsub.f32 %v803, %v887
      %v904 = vsub.f32 %v808, %v888
      %v905 = vsub.f32 %v811, %v889
      %v906 = vsub.f32 %v816, %v890
      %v907 = vsub.f32 %v819, %v891
      %v908 = vsub.f32 %v824, %v892
      %v909 = vsub.f32 %v827, %v893
      %v910 = vmul.f32 %v894, %v894
      %v911 = vmul.f32 %v895, %v895
      %v912 = vmul.f32 %v896, %v896
      %v913 = vmul.f32 %v897, %v897
      %v914 = vmul.f32 %v898, %v898
      %v915 = vmul.f32 %v899, %v899
      %v916 = vmul.f32 %v900, %v900
      %v917 = vmul.f32 %v901, %v901
      %v918 = vmul.f32 %v902, %v902
      %v919 = vmul.f32 %v903, %v903
      %v920 = vmul.f32 %v904, %v904
      %v921 = vmul.f32 %v905, %v905
      %v922 = vmul.f32 %v906, %v906
      %v923 = vmul.f32 %v907, %v907
      %v924 = vmul.f32 %v908, %v908
      %v925 = vmul.f32 %v909, %v909
      %v926 = vsel %vm415, %v910, 0.0
      %927 = vadd.xlane.f32.xlu0 %v926
      %v928 = vpop.xlane.xlu0 %927
      %v929 = vsel %vm415, %v911, 0.0
      %930 = vadd.xlane.f32.xlu0 %v929
      %v931 = vpop.xlane.xlu0 %930
      %v932 = vsel %vm415, %v912, 0.0
      %933 = vadd.xlane.f32.xlu0 %v932
      %v934 = vpop.xlane.xlu0 %933
      %v935 = vsel %vm415, %v913, 0.0
      %936 = vadd.xlane.f32.xlu0 %v935
      %v937 = vpop.xlane.xlu0 %936
      %v938 = vsel %vm415, %v914, 0.0
      %939 = vadd.xlane.f32.xlu0 %v938
      %v940 = vpop.xlane.xlu0 %939
      %v941 = vsel %vm415, %v915, 0.0
      %942 = vadd.xlane.f32.xlu0 %v941
      %v943 = vpop.xlane.xlu0 %942
      %v944 = vsel %vm415, %v916, 0.0
      %945 = vadd.xlane.f32.xlu0 %v944
      %v946 = vpop.xlane.xlu0 %945
      %v947 = vsel %vm415, %v917, 0.0
      %948 = vadd.xlane.f32.xlu0 %v947
      %v949 = vpop.xlane.xlu0 %948
      %v950 = vsel %vm415, %v918, 0.0
      %951 = vadd.xlane.f32.xlu0 %v950
      %v952 = vpop.xlane.xlu0 %951
      %v953 = vsel %vm415, %v919, 0.0
      %954 = vadd.xlane.f32.xlu0 %v953
      %v955 = vpop.xlane.xlu0 %954
      %v956 = vsel %vm415, %v920, 0.0
      %957 = vadd.xlane.f32.xlu0 %v956
      %v958 = vpop.xlane.xlu0 %957
      %v959 = vsel %vm415, %v921, 0.0
      %960 = vadd.xlane.f32.xlu0 %v959
      %v961 = vpop.xlane.xlu0 %960
      %v962 = vsel %vm415, %v922, 0.0
      %963 = vadd.xlane.f32.xlu0 %v962
      %v964 = vpop.xlane.xlu0 %963
      %v965 = vsel %vm415, %v923, 0.0
      %966 = vadd.xlane.f32.xlu0 %v965
      %v967 = vpop.xlane.xlu0 %966
      %v968 = vsel %vm415, %v924, 0.0
      %969 = vadd.xlane.f32.xlu0 %v968
      %v970 = vpop.xlane.xlu0 %969
      %v971 = vsel %vm415, %v925, 0.0
      %972 = vadd.xlane.f32.xlu0 %v971
      %v973 = vpop.xlane.xlu0 %972
      %v974 = vmul.f32 %v928, %v464
      %v975 = vmul.f32 %v931, %v464
      %v976 = vmul.f32 %v934, %v464
      %v977 = vmul.f32 %v937, %v464
      %v978 = vmul.f32 %v940, %v464
      %v979 = vmul.f32 %v943, %v464
      %v980 = vmul.f32 %v946, %v464
      %v981 = vmul.f32 %v949, %v464
      %v982 = vmul.f32 %v952, %v464
      %v983 = vmul.f32 %v955, %v464
      %v984 = vmul.f32 %v958, %v464
      %v985 = vmul.f32 %v961, %v464
      %v986 = vmul.f32 %v964, %v464
      %v987 = vmul.f32 %v967, %v464
      %v988 = vmul.f32 %v970, %v464
      %v989 = vmul.f32 %v973, %v464
      %v990 = vadd.f32 %v974, 1e-05
      %v991 = vadd.f32 %v975, 1e-05
      %v992 = vadd.f32 %v976, 1e-05
      %v993 = vadd.f32 %v977, 1e-05
      %v994 = vadd.f32 %v978, 1e-05
      %v995 = vadd.f32 %v979, 1e-05
      %v996 = vadd.f32 %v980, 1e-05
      %v997 = vadd.f32 %v981, 1e-05
      %v998 = vadd.f32 %v982, 1e-05
      %v999 = vadd.f32 %v983, 1e-05
      %v1000 = vadd.f32 %v984, 1e-05
      %v1001 = vadd.f32 %v985, 1e-05
      %v1002 = vadd.f32 %v986, 1e-05
      %v1003 = vadd.f32 %v987, 1e-05
      %v1004 = vadd.f32 %v988, 1e-05
      %v1005 = vadd.f32 %v989, 1e-05
      %v1006 = vrsqrt.pop %v990
      %v1007 = vrsqrt.pop %v991
      %v1008 = vrsqrt.pop %v992
      %v1009 = vrsqrt.pop %v993
      %v1010 = vrsqrt.pop %v994
      %v1011 = vrsqrt.pop %v995
      %v1012 = vrsqrt.pop %v996
      %v1013 = vrsqrt.pop %v997
      %v1014 = vrsqrt.pop %v998
      %v1015 = vrsqrt.pop %v999
      %v1016 = vrsqrt.pop %v1000
      %v1017 = vrsqrt.pop %v1001
      %v1018 = vrsqrt.pop %v1002
      %v1019 = vrsqrt.pop %v1003
      %v1020 = vrsqrt.pop %v1004
      %v1021 = vrsqrt.pop %v1005
      %v1022 = vlaneseq
      %v1023 = vshrl.u32 %v1022, 7
      %v1024 = vsub.s32 4, %v1023
      %v1025 = vrot.slane %v256, %v1024
      %v1026 = vmul.f32 %v1006, %v1025
      %v1027 = vmul.f32 %v1007, %v1025
      %v1028 = vmul.f32 %v1008, %v1025
      %v1029 = vmul.f32 %v1009, %v1025
      %v1030 = vmul.f32 %v1010, %v1025
      %v1031 = vmul.f32 %v1011, %v1025
      %v1032 = vmul.f32 %v1012, %v1025
      %v1033 = vmul.f32 %v1013, %v1025
      %v1034 = vmul.f32 %v1014, %v1025
      %v1035 = vmul.f32 %v1015, %v1025
      %v1036 = vmul.f32 %v1016, %v1025
      %v1037 = vmul.f32 %v1017, %v1025
      %v1038 = vmul.f32 %v1018, %v1025
      %v1039 = vmul.f32 %v1019, %v1025
      %v1040 = vmul.f32 %v1020, %v1025
      %v1041 = vmul.f32 %v1021, %v1025
      %v1042 = vmul.f32 %v894, %v1026
      %v1043 = vmul.f32 %v895, %v1027
      %v1044 = vmul.f32 %v896, %v1028
      %v1045 = vmul.f32 %v897, %v1029
      %v1046 = vmul.f32 %v898, %v1030
      %v1047 = vmul.f32 %v899, %v1031
      %v1048 = vmul.f32 %v900, %v1032
      %v1049 = vmul.f32 %v901, %v1033
      %v1050 = vmul.f32 %v902, %v1034
      %v1051 = vmul.f32 %v903, %v1035
      %v1052 = vmul.f32 %v904, %v1036
      %v1053 = vmul.f32 %v905, %v1037
      %v1054 = vmul.f32 %v906, %v1038
      %v1055 = vmul.f32 %v907, %v1039
      %v1056 = vmul.f32 %v908, %v1040
      %v1057 = vmul.f32 %v909, %v1041
      %v1058 = vlaneseq
      %v1059 = vshrl.u32 %v1058, 7
      %v1060 = vsub.s32 5, %v1059
      %v1061 = vrot.slane %v256, %v1060
      %v1062 = vadd.f32 %v1042, %v1061
      %v1063 = vadd.f32 %v1043, %v1061
      %v1064 = vadd.f32 %v1044, %v1061
      %v1065 = vadd.f32 %v1045, %v1061
      %v1066 = vadd.f32 %v1046, %v1061
      %v1067 = vadd.f32 %v1047, %v1061
      %v1068 = vadd.f32 %v1048, %v1061
      %v1069 = vadd.f32 %v1049, %v1061
      %v1070 = vadd.f32 %v1050, %v1061
      %v1071 = vadd.f32 %v1051, %v1061
      %v1072 = vadd.f32 %v1052, %v1061
      %v1073 = vadd.f32 %v1053, %v1061
      %v1074 = vadd.f32 %v1054, %v1061
      %v1075 = vadd.f32 %v1055, %v1061
      %v1076 = vadd.f32 %v1056, %v1061
      %v1077 = vadd.f32 %v1057, %v1061
      %v1078 = vmax.f32 %v1062, 0.0
      %v1079 = vmax.f32 %v1063, 0.0
      %v1080 = vmax.f32 %v1064, 0.0
      %v1081 = vmax.f32 %v1065, 0.0
      %v1082 = vmax.f32 %v1066, 0.0
      %v1083 = vmax.f32 %v1067, 0.0
      %v1084 = vmax.f32 %v1068, 0.0
      %v1085 = vmax.f32 %v1069, 0.0
      %v1086 = vmax.f32 %v1070, 0.0
      %v1087 = vmax.f32 %v1071, 0.0
      %v1088 = vmax.f32 %v1072, 0.0
      %v1089 = vmax.f32 %v1073, 0.0
      %v1090 = vmax.f32 %v1074, 0.0
      %v1091 = vmax.f32 %v1075, 0.0
      %v1092 = vmax.f32 %v1076, 0.0
      %v1093 = vmax.f32 %v1077, 0.0
      %v1094 = vpack.c.bf16 %v1079, %v1078
      %v1095 = vpack.c.bf16 %v1081, %v1080
      %v1096 = vpack.c.bf16 %v1083, %v1082
      %v1097 = vpack.c.bf16 %v1085, %v1084
      %v1098 = vpack.c.bf16 %v1087, %v1086
      %v1099 = vpack.c.bf16 %v1089, %v1088
      %v1100 = vpack.c.bf16 %v1091, %v1090
      %v1101 = vpack.c.bf16 %v1093, %v1092
      %v1102 = vld [vmem:[%s3] sm:$0xf]
      %v1103 = vld [vmem:[%s3 + $0x4] sm:$0xf]
      %v1104 = vld [vmem:[%s3 + $0x8] sm:$0xf]
      %v1105 = vld [vmem:[%s3 + $0xc] sm:$0xf]
      %v1106 = vld [vmem:[%s5] sm:$0x1]
      %v1108 = vlaneseq
      %v1109 = vshrl.u32 %v1108, 7
      %v1110 = vsub.s32 0, %v1109
      %v1111 = vrot.slane %v1106, %v1110
      %v1117 = vunpack.c.l.b16 %v1102
      %v1118 = vunpack.c.l.b16 %v1103
      %v1119 = vunpack.c.l.b16 %v1104
      %v1120 = vunpack.c.l.b16 %v1105
      %v1121 = vpack.c.b16 %v1118, %v1117
      %v1122 = vpack.c.b16 %v1120, %v1119
      %v1126 = vsel %vm415, %v1094, 0
      %v1129 = vsel %vm415, %v1095, 0
      %v1132 = vsel %vm415, %v1096, 0
      %v1135 = vsel %vm415, %v1097, 0
      %v1138 = vsel %vm415, %v1098, 0
      %v1141 = vsel %vm415, %v1099, 0
      %v1144 = vsel %vm415, %v1100, 0
      %v1147 = vsel %vm415, %v1101, 0
      %1149 = vmatprep.subr.bf16.mxu0 0
      %1150 = vmatpush1.bf16.msra.mxu0 %v1121
      %1151 = vmatprep.subr.bf16.mxu0 0
      %1152 = vmatpush1.bf16.msra.mxu0 %v1122
      %1153 = vmatprep.subr.bf16.mxu0 0
      %1154 = vmatpush1.bf16.msra.mxu0 0
      %1155 = vmatprep.subr.bf16.mxu0 0
      %1156 = vmatpush1.bf16.msra.mxu0 0
      %1157 = vmatprep.subr.bf16.mxu0 0
      %1158 = vmatpush1.bf16.msra.mxu0 0
      %1159 = vmatprep.subr.bf16.mxu0 0
      %1160 = vmatpush1.bf16.msra.mxu0 0
      %1161 = vmatprep.subr.bf16.mxu0 0
      %1162 = vmatpush1.bf16.msra.mxu0 0
      %1163 = vmatprep.subr.bf16.mxu0 0
      %1164 = vmatpush1.bf16.msra.mxu0 0
      %1165 = vmatprep.subr.bf16.mxu0 0
      %1166 = vmatpush1.bf16.msra.mxu0 0
      %1167 = vmatprep.subr.bf16.mxu0 0
      %1168 = vmatpush1.bf16.msra.mxu0 0
      %1169 = vmatprep.subr.bf16.mxu0 0
      %1170 = vmatpush1.bf16.msra.mxu0 0
      %1171 = vmatprep.subr.bf16.mxu0 0
      %1172 = vmatpush1.bf16.msra.mxu0 0
      %1173 = vmatprep.subr.bf16.mxu0 0
      %1174 = vmatpush1.bf16.msra.mxu0 0
      %1175 = vmatprep.subr.bf16.mxu0 0
      %1176 = vmatpush1.bf16.msra.mxu0 0
      %1177 = vmatprep.subr.bf16.mxu0 0
      %1178 = vmatpush1.bf16.msra.mxu0 0
      %1179 = vmatprep.subr.bf16.mxu0 0
      %1180 = vmatpush1.bf16.msra.mxu0 0
      %1181 = vmatprep.mubr.bf16.mxu0 0
      %1182 = vmatmul.mubr.bf16.gmra.mrb[0].mxu0 %v1126
      %v1183 = vpop.f32.mrb[0].mxu0
      %v1184 = vadd.f32 %v1111, %v1183
      %v1185 = vpop.f32.mrb[0].mxu0
      %v1186 = vpop.f32.mrb[0].mxu0
      %v1187 = vadd.f32 %v1111, %v1186
      %v1188 = vpop.f32.mrb[0].mxu0
      %1189 = vmatprep.mubr.bf16.mxu0 0
      %1190 = vmatmul.mubr.bf16.gmra.mrb[0].mxu0 %v1129
      %v1191 = vpop.f32.mrb[0].mxu0
      %v1192 = vadd.f32 %v1111, %v1191
      %v1193 = vpop.f32.mrb[0].mxu0
      %v1194 = vpop.f32.mrb[0].mxu0
      %v1195 = vadd.f32 %v1111, %v1194
      %v1196 = vpop.f32.mrb[0].mxu0
      %1197 = vmatprep.mubr.bf16.mxu0 0
      %1198 = vmatmul.mubr.bf16.gmra.mrb[0].mxu0 %v1132
      %v1199 = vpop.f32.mrb[0].mxu0
      %v1200 = vadd.f32 %v1111, %v1199
      %v1201 = vpop.f32.mrb[0].mxu0
      %v1202 = vpop.f32.mrb[0].mxu0
      %v1203 = vadd.f32 %v1111, %v1202
      %v1204 = vpop.f32.mrb[0].mxu0
      %1205 = vmatprep.mubr.bf16.mxu0 0
      %1206 = vmatmul.mubr.bf16.gmra.mrb[0].mxu0 %v1135
      %v1207 = vpop.f32.mrb[0].mxu0
      %v1208 = vadd.f32 %v1111, %v1207
      %v1209 = vpop.f32.mrb[0].mxu0
      %v1210 = vpop.f32.mrb[0].mxu0
      %v1211 = vadd.f32 %v1111, %v1210
      %v1212 = vpop.f32.mrb[0].mxu0
      %1213 = vmatprep.mubr.bf16.mxu0 0
      %1214 = vmatmul.mubr.bf16.gmra.mrb[0].mxu0 %v1138
      %v1215 = vpop.f32.mrb[0].mxu0
      %v1216 = vadd.f32 %v1111, %v1215
      %v1217 = vpop.f32.mrb[0].mxu0
      %v1218 = vpop.f32.mrb[0].mxu0
      %v1219 = vadd.f32 %v1111, %v1218
      %v1220 = vpop.f32.mrb[0].mxu0
      %1221 = vmatprep.mubr.bf16.mxu0 0
      %1222 = vmatmul.mubr.bf16.gmra.mrb[0].mxu0 %v1141
      %v1223 = vpop.f32.mrb[0].mxu0
      %v1224 = vadd.f32 %v1111, %v1223
      %v1225 = vpop.f32.mrb[0].mxu0
      %v1226 = vpop.f32.mrb[0].mxu0
      %v1227 = vadd.f32 %v1111, %v1226
      %v1228 = vpop.f32.mrb[0].mxu0
      %1229 = vmatprep.mubr.bf16.mxu0 0
      %1230 = vmatmul.mubr.bf16.gmra.mrb[0].mxu0 %v1144
      %v1231 = vpop.f32.mrb[0].mxu0
      %v1232 = vadd.f32 %v1111, %v1231
      %v1233 = vpop.f32.mrb[0].mxu0
      %v1234 = vpop.f32.mrb[0].mxu0
      %v1235 = vadd.f32 %v1111, %v1234
      %v1236 = vpop.f32.mrb[0].mxu0
      %1237 = vmatprep.mubr.bf16.mxu0 0
      %1238 = vmatmul.mubr.bf16.gmra.mrb[0].mxu0 %v1147
      %v1239 = vpop.f32.mrb[0].mxu0
      %v1240 = vadd.f32 %v1111, %v1239
      %v1241 = vpop.f32.mrb[0].mxu0
      %v1242 = vpop.f32.mrb[0].mxu0
      %v1243 = vadd.f32 %v1111, %v1242
      %v1244 = vpop.f32.mrb[0].mxu0
      %1245 = vdwg.mxu0
      %vm1246 = vcmask 64512
      %1247 = vst.msk [vmem:[%s253] sm:$0xff] %vm1246, %v1184
      %1248 = vst.msk [vmem:[%s253 + $0x8] sm:$0xff] %vm1246, %v1187
      %1249 = vst.msk [vmem:[%s253 + $0x10] sm:$0xff] %vm1246, %v1192
      %1250 = vst.msk [vmem:[%s253 + $0x18] sm:$0xff] %vm1246, %v1195
      %1251 = vst.msk [vmem:[%s253 + $0x20] sm:$0xff] %vm1246, %v1200
      %1252 = vst.msk [vmem:[%s253 + $0x28] sm:$0xff] %vm1246, %v1203
      %1253 = vst.msk [vmem:[%s253 + $0x30] sm:$0xff] %vm1246, %v1208
      %1254 = vst.msk [vmem:[%s253 + $0x38] sm:$0xff] %vm1246, %v1211
      %1255 = vst.msk [vmem:[%s253 + $0x40] sm:$0xff] %vm1246, %v1216
      %1256 = vst.msk [vmem:[%s253 + $0x48] sm:$0xff] %vm1246, %v1219
      %1257 = vst.msk [vmem:[%s253 + $0x50] sm:$0xff] %vm1246, %v1224
      %1258 = vst.msk [vmem:[%s253 + $0x58] sm:$0xff] %vm1246, %v1227
      %1259 = vst.msk [vmem:[%s253 + $0x60] sm:$0xff] %vm1246, %v1232
      %1260 = vst.msk [vmem:[%s253 + $0x68] sm:$0xff] %vm1246, %v1235
      %1261 = vst.msk [vmem:[%s253 + $0x70] sm:$0xff] %vm1246, %v1240
      %1262 = vst.msk [vmem:[%s253 + $0x78] sm:$0xff] %vm1246, %v1243
      %s1263 = smul.u32 16, %s17
      %p1264 = scmp.lt.s32.totalorder %s1263, 31
      %s1265 = scalar_select %p1264, %s1263, 31
      %s1266 = smul.addr %s1265, 8
      %s1267 = scalar_lea.vmem %s6, %s1266
      // Predicated region
      $region45: #{tpu_custom_call.1} parent=43 // pred_check
        %p1268 = pneg %p166
      $region46: #{tpu_custom_call.1} parent=43 // pred_check_branch
        %1270 = sbr.rel (%p1268) target = $region48
      $region47: #{tpu_custom_call.1} parent=43 // pred_region
        %s1271 = smul.u32 16, %s17
      $region48: #{tpu_custom_call.1} parent=43 // pred_fallthru
        _
    $region44: #{tpu_custom_call.1} parent=5 // pred_fallthru
      _
    %p1272 = scmp.le.s32.totalorder 2, %s12
    // Predicated region
    $region49: #{tpu_custom_call.1} parent=5 // pred_check
      %p1273 = pneg %p1272
    $region50: #{tpu_custom_call.1} parent=5 // pred_check_branch
      %1275 = sbr.rel (%p1273) target = $region52
    $region51: #{tpu_custom_call.1} parent=5 // pred_region
      %s1276 = ssub.s32 %s12, 2
      // Predicated region
      $region53: #{tpu_custom_call.1} parent=51 // pred_check
        %p1277 = pneg %p172
      $region54: #{tpu_custom_call.1} parent=51 // pred_check_branch
        %1279 = sbr.rel (%p1277) target = $region56
      $region55: #{tpu_custom_call.1} parent=51 // pred_region
        %s1280 = smul.u32 16, %s18
        %p1281 = scmp.lt.s32.totalorder %s1280, 31
        %s1282 = scalar_select %p1281, %s1280, 31
        %s1283 = smul.addr %s1282, 8
        %s1284 = scalar_lea.vmem %s6, %s1283
      $region56: #{tpu_custom_call.1} parent=51 // pred_fallthru
        _
    $region52: #{tpu_custom_call.1} parent=5 // pred_fallthru
      _
  $region6: #{tpu_custom_call.1} parent=0 // loop_footer
    %s16 = sadd.s32 1, %s12
  $region7: #{tpu_custom_call.1} parent=0 // loop_footer_branch
    %11 = sbr.rel target = $region3
  $region8: #{tpu_custom_call.1} parent=0 // loop_exit
    _

</llo_original>
